<compile_context>
chip_gen: v7x
topology: tpu7x:2x2x1
jax: 0.10.0
libtpu: 0.0.40
codegen_flags: <defaults>
</compile_context>

<pallas_src>
import jax
import jax.numpy as jnp
from jax import lax
from jax.experimental import pallas as pl
from jax.experimental.pallas import tpu as pltpu


def _cat_pwconv_kernel(x_ref, y_ref, wx_ref, wy_ref, b_ref, o_ref):
    # Batch-in-grid variant.
    # x_ref: (Cx, tHW), y_ref: (Cy, tHW)
    # wx_ref: (tCo, Cx), wy_ref: (tCo, Cy), b_ref: (tCo, 1)
    # o_ref: (tCo, tHW)  -- spatial on the lane axis.
    acc = jnp.dot(wx_ref[...], x_ref[...], preferred_element_type=jnp.float32)
    acc = acc + jnp.dot(wy_ref[...], y_ref[...], preferred_element_type=jnp.float32)
    acc = acc + b_ref[...].astype(jnp.float32)
    o_ref[...] = acc.astype(o_ref.dtype)


def _cat_pwconv_kernel_batched(x_ref, y_ref, wx_ref, wy_ref, b_ref, o_ref):
    # Batch-in-block variant (small images): loop over N inside the kernel.
    # x_ref: (N, Cx, tHW), y_ref: (N, Cy, tHW), o_ref: (N, tCo, tHW)
    wx = wx_ref[...]
    wy = wy_ref[...]
    b = b_ref[...].astype(jnp.float32)
    n_imgs = x_ref.shape[0]

    def body(n, carry):
        acc = jnp.dot(wx, x_ref[n], preferred_element_type=jnp.float32)
        acc = acc + jnp.dot(wy, y_ref[n], preferred_element_type=jnp.float32)
        o_ref[n] = (acc + b).astype(o_ref.dtype)
        return carry

    lax.fori_loop(0, n_imgs, body, 0, unroll=True)


def _round_down(v, m):
    return (v // m) * m


def _cdiv(a, b):
    return -(-a // b)


def cat_pwconv_fusion(x, y, weight, bias):
    """Fused concat + 1x1 conv.

    x: (N, Cx, H, W), y: (N, Cy, H, W)  (NCHW, same N/H/W)
    weight: (C_out, Cx + Cy, 1, 1)   (PyTorch Conv2d layout)
    bias: (C_out,)
    Returns (N, C_out, H, W).
    """
    N, Cx, H, W = x.shape
    Ny, Cy, Hy, Wy = y.shape
    assert (N, H, W) == (Ny, Hy, Wy)
    C_in = Cx + Cy
    C_out = weight.shape[0]
    assert weight.shape == (C_out, C_in, 1, 1)
    HW = H * W

    # Promotion rule: output follows input/weight promotion (f32 weight with
    # bf16 activations -> f32 output). Dots always accumulate in f32.
    out_dtype = jnp.result_type(x.dtype, y.dtype, weight.dtype)

    # Free reshapes only (spatial is already innermost in NCHW).
    xf = x.reshape(N, Cx, HW)
    yf = y.reshape(N, Cy, HW)
    w2 = weight[:, :, 0, 0]        # (C_out, C_in)
    wx = w2[:, :Cx]                # (C_out, Cx)
    wy = w2[:, Cx:]                # (C_out, Cy)
    b2 = bias.reshape(C_out, 1)

    in_item = jnp.dtype(x.dtype).itemsize
    w_item = jnp.dtype(weight.dtype).itemsize
    out_item = jnp.dtype(out_dtype).itemsize

    # ---- Generation-aware VMEM budget ------------------------------------
    try:
        vmem_cap = pltpu.get_tpu_info().vmem_capacity_bytes
    except Exception:  # pragma: no cover - conservative fallback
        vmem_cap = 128 * 1024 * 1024
    is_v7x_class = vmem_cap <= 64 * 1024 * 1024
    if is_v7x_class:                      # 64 MiB VMEM per TensorCore
        budget = 32 * 1024 * 1024
        vmem_limit = 48 * 1024 * 1024
    else:                                 # v5e / v6e: 128 MiB physical VMEM
        budget = 80 * 1024 * 1024
        vmem_limit = 100 * 1024 * 1024

    # ---- C_out tiling (only when the whole weight is too big) ------------
    full_w_bytes = (C_out * C_in + C_out) * w_item
    if full_w_bytes <= budget // 4:
        t_co, n_co, w_buf = C_out, 1, 1   # stationary, single-buffered
    else:
        t_co = min(C_out, 256)            # full MXU N-dim tiles
        n_co = _cdiv(C_out, t_co)
        w_buf = 1 if n_co == 1 else 2
    w_bytes = w_buf * (t_co * C_in + t_co) * w_item

    # ---- Spatial tile: direct solve against the budget --------------------
    def _solve_lanes(batch_factor):
        per_lane = 2 * batch_factor * ((Cx + Cy) * in_item + t_co * out_item)
        avail = budget - w_bytes
        return max(0, avail // per_lane)

    # Fold small batches into the block (fewer, fatter grid steps).
    per_image_io = HW * ((Cx + Cy) * in_item + C_out * out_item)
    fold_batch = per_image_io < 2 * 1024 * 1024
    lanes = _solve_lanes(N if fold_batch else 1)
    if fold_batch and lanes < min(HW, 512):
        fold_batch = False
        lanes = _solve_lanes(1)

    if lanes >= HW:
        t_hw = HW                          # full-extent block is always legal
    else:
        t_hw = _round_down(lanes, 512)     # DMA-friendly, full MXU passes
        if t_hw == 0:
            # TODO(synk): tile C_in ("arbitrary" axis + f32 VMEM accumulator)
            # instead of shrinking the spatial tile this far.
            t_hw = max(128, _round_down(lanes, 128))

    hw_tiles = _cdiv(HW, t_hw)
    batch_steps = 1 if fold_batch else N

    # v7x has 2 TensorCores: never leave one idle with a single-step grid.
    if is_v7x_class and batch_steps * n_co * hw_tiles < 2 and HW >= 256:
        t_hw = max(128, _round_down((HW + 1) // 2, 128))
        hw_tiles = _cdiv(HW, t_hw)

    # ---- Specs -------------------------------------------------------------
    def _w_spec(shape, index_map):
        if n_co == 1:
            # Constant block index -> single buffer, DMA'd once.
            return pl.BlockSpec(shape, index_map, pipeline_mode=pl.Buffered(1))
        return pl.BlockSpec(shape, index_map)

    flops = 2 * N * C_out * C_in * HW
    bytes_accessed = (N * (Cx + Cy) * HW * in_item
                      + N * C_out * HW * out_item
                      + (C_out * C_in + C_out) * w_item)
    cost = pl.CostEstimate(flops=flops, transcendentals=0,
                           bytes_accessed=bytes_accessed)

    if fold_batch:
        grid = (n_co, hw_tiles)
        in_specs = [
            pl.BlockSpec((N, Cx, t_hw), lambda co, j: (0, 0, j)),
            pl.BlockSpec((N, Cy, t_hw), lambda co, j: (0, 0, j)),
            _w_spec((t_co, Cx), lambda co, j: (co, 0)),
            _w_spec((t_co, Cy), lambda co, j: (co, 0)),
            _w_spec((t_co, 1), lambda co, j: (co, 0)),
        ]
        out_specs = pl.BlockSpec((N, t_co, t_hw), lambda co, j: (0, co, j))
        kernel = _cat_pwconv_kernel_batched
        semantics = ("parallel", "parallel")
    else:
        grid = (N, n_co, hw_tiles)
        in_specs = [
            pl.BlockSpec((None, Cx, t_hw), lambda n, co, j: (n, 0, j)),
            pl.BlockSpec((None, Cy, t_hw), lambda n, co, j: (n, 0, j)),
            _w_spec((t_co, Cx), lambda n, co, j: (co, 0)),
            _w_spec((t_co, Cy), lambda n, co, j: (co, 0)),
            _w_spec((t_co, 1), lambda n, co, j: (co, 0)),
        ]
        out_specs = pl.BlockSpec((None, t_co, t_hw), lambda n, co, j: (n, co, j))
        kernel = _cat_pwconv_kernel
        semantics = ("parallel", "parallel", "parallel")

    out_flat = pl.pallas_call(
        kernel,
        out_shape=jax.ShapeDtypeStruct((N, C_out, HW), out_dtype),
        grid_spec=pltpu.PrefetchScalarGridSpec(
            num_scalar_prefetch=0,
            grid=grid,
            in_specs=in_specs,
            out_specs=out_specs,
        ),
        compiler_params=pltpu.CompilerParams(
            dimension_semantics=semantics,
            vmem_limit_bytes=vmem_limit,
        ),
        cost_estimate=cost,
    )(xf, yf, wx, wy, b2)

    return out_flat.reshape(N, C_out, H, W)


def _reference(x, y, weight, bias):
    cat = jnp.concatenate([x, y], axis=1)  # NCHW concat on channels
    out = jnp.einsum("nchw,oc->nohw", cat, weight[:, :, 0, 0])
    return out + bias[None, :, None, None]


if __name__ == "__main__":
    key = jax.random.PRNGKey(0)
    kx, ky, kw, kb = jax.random.split(key, 4)

    # x and y each carry half of in_channels (concat gives in_channels total).
    N, Cx, Cy, H, W = 2, 4, 4, 16, 16
    in_channels = Cx + Cy                  # 8
    out_channels = in_channels // 2        # default: in_channels // 2 = 4

    x = jax.random.normal(kx, (N, Cx, H, W), dtype=jnp.float32)
    y = jax.random.normal(ky, (N, Cy, H, W), dtype=jnp.float32)

    # Deterministic parameter init (mimics Conv2d uniform fan-in scaling).
    bound = 1.0 / (in_channels ** 0.5)
    weight = jax.random.uniform(
        kw, (out_channels, in_channels, 1, 1), jnp.float32, -bound, bound)
    bias = jax.random.uniform(kb, (out_channels,), jnp.float32, -bound, bound)

    out = cat_pwconv_fusion(x, y, weight, bias)
    out = jax.block_until_ready(out)

    ref = _reference(x, y, weight, bias)
    assert out.shape == (N, out_channels, H, W)
    assert jnp.allclose(out, ref, atol=1e-5, rtol=1e-5)

    print("KERNEL_OK")
</pallas_src>

<mosaic_0001>
module attributes {stable_mosaic.version = 11 : i64} {
  func.func @_cat_pwconv_kernel_batched(%arg0: i32, %arg1: i32, %arg2: memref<2x4x256xf32, #tpu.memory_space<vmem>>, %arg3: memref<2x4x256xf32, #tpu.memory_space<vmem>>, %arg4: memref<4x4xf32, #tpu.memory_space<vmem>>, %arg5: memref<4x4xf32, #tpu.memory_space<vmem>>, %arg6: memref<4x1xf32, #tpu.memory_space<vmem>>, %arg7: memref<2x4x256xf32, #tpu.memory_space<vmem>>) attributes {dimension_semantics = [#tpu.dimension_semantics<parallel>, #tpu.dimension_semantics<parallel>], iteration_bounds = array<i64: 1, 1>, scalar_prefetch = 0 : i64, scratch_operands = 0 : i64, tpu.core_type = #tpu.core_type<tc>, window_params = [{transform_indices = @transform_0, window_bounds = array<i64: 2, 4, 256>}, {transform_indices = @transform_1, window_bounds = array<i64: 2, 4, 256>}, {pipeline_mode = #tpu.pipeline_mode<synchronous>, transform_indices = @transform_2, window_bounds = array<i64: 4, 4>}, {pipeline_mode = #tpu.pipeline_mode<synchronous>, transform_indices = @transform_3, window_bounds = array<i64: 4, 4>}, {pipeline_mode = #tpu.pipeline_mode<synchronous>, transform_indices = @transform_4, window_bounds = array<i64: 4, 1>}, {transform_indices = @transform_5, window_bounds = array<i64: 2, 4, 256>}]} {
    %c0 = arith.constant 0 : index
    %c0_0 = arith.constant 0 : index
    %0 = vector.load %arg4[%c0, %c0_0] : memref<4x4xf32, #tpu.memory_space<vmem>>, vector<4x4xf32>
    %c0_1 = arith.constant 0 : index
    %c0_2 = arith.constant 0 : index
    %1 = vector.load %arg5[%c0_1, %c0_2] : memref<4x4xf32, #tpu.memory_space<vmem>>, vector<4x4xf32>
    %c0_3 = arith.constant 0 : index
    %c0_4 = arith.constant 0 : index
    %2 = vector.load %arg6[%c0_3, %c0_4] : memref<4x1xf32, #tpu.memory_space<vmem>>, vector<4x1xf32>
    %c0_i32 = arith.constant 0 : i32
    %3 = arith.index_cast %c0_i32 : i32 to index
    %c0_5 = arith.constant 0 : index
    %c0_6 = arith.constant 0 : index
    %4 = vector.load %arg2[%3, %c0_5, %c0_6] : memref<2x4x256xf32, #tpu.memory_space<vmem>>, vector<1x4x256xf32>
    %5 = vector.shape_cast %4 : vector<1x4x256xf32> to vector<4x256xf32>
    %cst = arith.constant dense<0.000000e+00> : vector<4x256xf32>
    %6 = tpu.matmul %0, %5, %cst {dimension_numbers = #tpu.dot_dimension_numbers<[1], [0], [0], [1], [0, 0, 1, 1], [], []>} : vector<4x4xf32>, vector<4x256xf32>, vector<4x256xf32> -> vector<4x256xf32>
    %7 = arith.index_cast %c0_i32 : i32 to index
    %c0_7 = arith.constant 0 : index
    %c0_8 = arith.constant 0 : index
    %8 = vector.load %arg3[%7, %c0_7, %c0_8] : memref<2x4x256xf32, #tpu.memory_space<vmem>>, vector<1x4x256xf32>
    %9 = vector.shape_cast %8 : vector<1x4x256xf32> to vector<4x256xf32>
    %cst_9 = arith.constant dense<0.000000e+00> : vector<4x256xf32>
    %10 = tpu.matmul %1, %9, %cst_9 {dimension_numbers = #tpu.dot_dimension_numbers<[1], [0], [0], [1], [0, 0, 1, 1], [], []>} : vector<4x4xf32>, vector<4x256xf32>, vector<4x256xf32> -> vector<4x256xf32>
    %11 = arith.addf %6, %10 : vector<4x256xf32>
    %12 = vector.broadcast %2 : vector<4x1xf32> to vector<4x256xf32>
    %13 = arith.addf %11, %12 : vector<4x256xf32>
    %14 = arith.index_cast %c0_i32 : i32 to index
    %c0_10 = arith.constant 0 : index
    %c0_11 = arith.constant 0 : index
    %15 = vector.load %arg7[%14, %c0_10, %c0_11] : memref<2x4x256xf32, #tpu.memory_space<vmem>>, vector<1x4x256xf32>
    %16 = vector.shape_cast %15 : vector<1x4x256xf32> to vector<4x256xf32>
    %17 = vector.shape_cast %13 : vector<4x256xf32> to vector<1x4x256xf32>
    tpu.vector_store %arg7[%14, %c0_10, %c0_11], %17 {strides = array<i32>} : memref<2x4x256xf32, #tpu.memory_space<vmem>>, vector<1x4x256xf32>,
    %c1_i32 = arith.constant 1 : i32
    %18 = arith.index_cast %c1_i32 : i32 to index
    %c0_12 = arith.constant 0 : index
    %c0_13 = arith.constant 0 : index
    %19 = vector.load %arg2[%18, %c0_12, %c0_13] : memref<2x4x256xf32, #tpu.memory_space<vmem>>, vector<1x4x256xf32>
    %20 = vector.shape_cast %19 : vector<1x4x256xf32> to vector<4x256xf32>
    %cst_14 = arith.constant dense<0.000000e+00> : vector<4x256xf32>
    %21 = tpu.matmul %0, %20, %cst_14 {dimension_numbers = #tpu.dot_dimension_numbers<[1], [0], [0], [1], [0, 0, 1, 1], [], []>} : vector<4x4xf32>, vector<4x256xf32>, vector<4x256xf32> -> vector<4x256xf32>
    %22 = arith.index_cast %c1_i32 : i32 to index
    %c0_15 = arith.constant 0 : index
    %c0_16 = arith.constant 0 : index
    %23 = vector.load %arg3[%22, %c0_15, %c0_16] : memref<2x4x256xf32, #tpu.memory_space<vmem>>, vector<1x4x256xf32>
    %24 = vector.shape_cast %23 : vector<1x4x256xf32> to vector<4x256xf32>
    %cst_17 = arith.constant dense<0.000000e+00> : vector<4x256xf32>
    %25 = tpu.matmul %1, %24, %cst_17 {dimension_numbers = #tpu.dot_dimension_numbers<[1], [0], [0], [1], [0, 0, 1, 1], [], []>} : vector<4x4xf32>, vector<4x256xf32>, vector<4x256xf32> -> vector<4x256xf32>
    %26 = arith.addf %21, %25 : vector<4x256xf32>
    %27 = vector.broadcast %2 : vector<4x1xf32> to vector<4x256xf32>
    %28 = arith.addf %26, %27 : vector<4x256xf32>
    %29 = arith.index_cast %c1_i32 : i32 to index
    %c0_18 = arith.constant 0 : index
    %c0_19 = arith.constant 0 : index
    %30 = vector.load %arg7[%29, %c0_18, %c0_19] : memref<2x4x256xf32, #tpu.memory_space<vmem>>, vector<1x4x256xf32>
    %31 = vector.shape_cast %30 : vector<1x4x256xf32> to vector<4x256xf32>
    %32 = vector.shape_cast %28 : vector<4x256xf32> to vector<1x4x256xf32>
    tpu.vector_store %arg7[%29, %c0_18, %c0_19], %32 {strides = array<i32>} : memref<2x4x256xf32, #tpu.memory_space<vmem>>, vector<1x4x256xf32>,
    %c2_i32 = arith.constant 2 : i32
    return
  }
  func.func @transform_0(%arg0: i32, %arg1: i32) -> (i32, i32, i32) {
    %c0_i32 = arith.constant 0 : i32
    %c0_i32_0 = arith.constant 0 : i32
    %c0_i32_1 = arith.constant 0 : i32
    return %c0_i32, %c0_i32_0, %arg1 : i32, i32, i32
  }
  func.func @transform_1(%arg0: i32, %arg1: i32) -> (i32, i32, i32) {
    %c0_i32 = arith.constant 0 : i32
    %c0_i32_0 = arith.constant 0 : i32
    %c0_i32_1 = arith.constant 0 : i32
    return %c0_i32, %c0_i32_0, %arg1 : i32, i32, i32
  }
  func.func @transform_2(%arg0: i32, %arg1: i32) -> (i32, i32) {
    %c0_i32 = arith.constant 0 : i32
    %c0_i32_0 = arith.constant 0 : i32
    return %arg0, %c0_i32 : i32, i32
  }
  func.func @transform_3(%arg0: i32, %arg1: i32) -> (i32, i32) {
    %c0_i32 = arith.constant 0 : i32
    %c0_i32_0 = arith.constant 0 : i32
    return %arg0, %c0_i32 : i32, i32
  }
  func.func @transform_4(%arg0: i32, %arg1: i32) -> (i32, i32) {
    %c0_i32 = arith.constant 0 : i32
    %c0_i32_0 = arith.constant 0 : i32
    return %arg0, %c0_i32 : i32, i32
  }
  func.func @transform_5(%arg0: i32, %arg1: i32) -> (i32, i32, i32) {
    %c0_i32 = arith.constant 0 : i32
    %c0_i32_0 = arith.constant 0 : i32
    return %c0_i32, %arg0, %arg1 : i32, i32, i32
  }
}

</mosaic_0001>

<llo_original>
// kernel: tpu_custom_call.1
$region0: #{tpu_custom_call.1}
  #allocation0 [shape = 'u32[]', space=smem, size = 0x4, offset = 0x4, fixed_abs, tag = 'smem constant byte address 0x4 - core index']
  #allocation1 [shape = 'u32[144,128]{1,0:T(1,128)}', space=vmem, size = 0x12000, scoped, tag = 'internal scratch']
  %s0 = inlined_call_operand.hbm [shape: f32[2,4,256], index: 0, kind: input, shape index: {}]
  %s1 = inlined_call_operand.hbm [shape: f32[2,4,256], index: 1, kind: input, shape index: {}]
  %s2 = inlined_call_operand.hbm [shape: f32[4,4], index: 2, kind: input, shape index: {}]
  %s3 = inlined_call_operand.hbm [shape: f32[4,4], index: 3, kind: input, shape index: {}]
  %s4 = inlined_call_operand.hbm [shape: f32[4,1], index: 4, kind: input, shape index: {}]
  %s5 = inlined_call_operand.hbm [shape: f32[2,4,256], index: 5, kind: output, shape index: {}]
  %s6 = sld [smem:[#allocation0]]
  $region50: #{tpu_custom_call.1} parent=0
    _
  %s8 = ssub.s32 1, %s6
  %s9 = scalar_select 0, %s8, %s6
  $region1: #{tpu_custom_call.1} parent=0
    #allocation2 [shape = 'u8[8192]{0}', space=vmem, size = 0x2000, scoped, tag = 'input window, operand 0, single buffered']
    #allocation3 [shape = 's32[1]{0}', space=sflag, size = 0x4, scoped, tag = 'scoped memory for tpu_custom_call.1']
    #allocation4 [shape = 's32[1]{0}', space=sflag, size = 0x4, scoped, tag = 'scoped memory for tpu_custom_call.1']
    #allocation5 [shape = 'u8[8192]{0}', space=vmem, size = 0x2000, scoped, tag = 'input window, operand 1, single buffered']
    #allocation6 [shape = 's32[1]{0}', space=sflag, size = 0x4, scoped, tag = 'scoped memory for tpu_custom_call.1']
    #allocation7 [shape = 'u8[2048]{0}', space=vmem, size = 0x800, scoped, tag = 'input window, operand 2, single buffered']
    #allocation8 [shape = 'u8[2048]{0}', space=vmem, size = 0x800, scoped, tag = 'input window, operand 3, single buffered']
    #allocation9 [shape = 's32[1]{0}', space=sflag, size = 0x4, scoped, tag = 'scoped memory for tpu_custom_call.1']
    #allocation10 [shape = 'u8[2048]{0}', space=vmem, size = 0x800, scoped, tag = 'input window, operand 4, single buffered']
    #allocation11 [shape = 'u8[8192]{0}', space=vmem, size = 0x2000, scoped, tag = 'output window, operand 0, single buffered']
    %10 = vsyncpa [#allocation3], 0
    %11 = vsyncpa [#allocation6], 0
    %12 = vsyncpa [#allocation9], 0
    %13 = vsyncpa [#allocation4], 0
    // Predicated region
    $region2: #{tpu_custom_call.1} parent=1 // pred_check
      _
    $region3: #{tpu_custom_call.1} parent=1 // pred_check_branch
      %15 = sbr.rel (0) target = $region5
    $region4: #{tpu_custom_call.1} parent=1 // pred_region
      %s17 = ssub.s32 256, 256
      %18 = vsyncadd [#allocation3], %s17
      %s19 = sshll.u32 [#allocation2], 4
      %s20 = int_to_ptr.vmem [resolvable:$true] %s19
      %25 = dma.hbm_to_vmem [thread:$0]  %s0, 256, %s20, [#allocation3], 128, 128, 8
    $region5: #{tpu_custom_call.1} parent=1 // pred_fallthru
      _
    // Predicated region
    $region6: #{tpu_custom_call.1} parent=1 // pred_check
      _
    $region7: #{tpu_custom_call.1} parent=1 // pred_check_branch
      %27 = sbr.rel (0) target = $region9
    $region8: #{tpu_custom_call.1} parent=1 // pred_region
      %s29 = ssub.s32 256, 256
      %30 = vsyncadd [#allocation6], %s29
      %s31 = sshll.u32 [#allocation5], 4
      %s32 = int_to_ptr.vmem [resolvable:$true] %s31
      %37 = dma.hbm_to_vmem [thread:$0]  %s1, 256, %s32, [#allocation6], 128, 128, 8
    $region9: #{tpu_custom_call.1} parent=1 // pred_fallthru
      _
    // Predicated region
    $region10: #{tpu_custom_call.1} parent=1 // pred_check
      _
    $region11: #{tpu_custom_call.1} parent=1 // pred_check_branch
      %39 = sbr.rel (0) target = $region13
    $region12: #{tpu_custom_call.1} parent=1 // pred_region
      %s41 = ssub.s32 64, 64
      %42 = vsyncadd [#allocation6], %s41
      %s44 = sshll.u32 [#allocation7], 4
      %s45 = int_to_ptr.vmem [resolvable:$true] %s44
      %47 = dma.hbm_to_vmem [thread:$0]  %s2, 64, %s45, [#allocation6]
    $region13: #{tpu_custom_call.1} parent=1 // pred_fallthru
      _
    // Predicated region
    $region14: #{tpu_custom_call.1} parent=1 // pred_check
      _
    $region15: #{tpu_custom_call.1} parent=1 // pred_check_branch
      %49 = sbr.rel (0) target = $region17
    $region16: #{tpu_custom_call.1} parent=1 // pred_region
      %s51 = ssub.s32 64, 64
      %52 = vsyncadd [#allocation9], %s51
      %s54 = sshll.u32 [#allocation8], 4
      %s55 = int_to_ptr.vmem [resolvable:$true] %s54
      %57 = dma.hbm_to_vmem [thread:$0]  %s3, 64, %s55, [#allocation9]
    $region17: #{tpu_custom_call.1} parent=1 // pred_fallthru
      _
    // Predicated region
    $region18: #{tpu_custom_call.1} parent=1 // pred_check
      _
    $region19: #{tpu_custom_call.1} parent=1 // pred_check_branch
      %59 = sbr.rel (0) target = $region21
    $region20: #{tpu_custom_call.1} parent=1 // pred_region
      %s61 = ssub.s32 64, 64
      %62 = vsyncadd [#allocation9], %s61
      %s64 = sshll.u32 [#allocation10], 4
      %s65 = int_to_ptr.vmem [resolvable:$true] %s64
      %67 = dma.hbm_to_vmem [thread:$0]  %s4, 64, %s65, [#allocation9]
    $region21: #{tpu_custom_call.1} parent=1 // pred_fallthru
      _
    // Predicated region
    $region22: #{tpu_custom_call.1} parent=1 // pred_check
      _
    $region23: #{tpu_custom_call.1} parent=1 // pred_check_branch
      %69 = sbr.rel (0) target = $region25
    $region24: #{tpu_custom_call.1} parent=1 // pred_region
      %70 = dma.done [#allocation3], 256
    $region25: #{tpu_custom_call.1} parent=1 // pred_fallthru
      _
    // Predicated region
    $region26: #{tpu_custom_call.1} parent=1 // pred_check
      _
    $region27: #{tpu_custom_call.1} parent=1 // pred_check_branch
      %72 = sbr.rel (0) target = $region29
    $region28: #{tpu_custom_call.1} parent=1 // pred_region
      %73 = dma.done [#allocation6], 256
    $region29: #{tpu_custom_call.1} parent=1 // pred_fallthru
      _
    // Predicated region
    $region30: #{tpu_custom_call.1} parent=1 // pred_check
      _
    $region31: #{tpu_custom_call.1} parent=1 // pred_check_branch
      %75 = sbr.rel (0) target = $region33
    $region32: #{tpu_custom_call.1} parent=1 // pred_region
      %76 = dma.done [#allocation6], 64
    $region33: #{tpu_custom_call.1} parent=1 // pred_fallthru
      _
    // Predicated region
    $region34: #{tpu_custom_call.1} parent=1 // pred_check
      _
    $region35: #{tpu_custom_call.1} parent=1 // pred_check_branch
      %78 = sbr.rel (0) target = $region37
    $region36: #{tpu_custom_call.1} parent=1 // pred_region
      %79 = dma.done [#allocation9], 64
    $region37: #{tpu_custom_call.1} parent=1 // pred_fallthru
      _
    // Predicated region
    $region38: #{tpu_custom_call.1} parent=1 // pred_check
      _
    $region39: #{tpu_custom_call.1} parent=1 // pred_check_branch
      %81 = sbr.rel (0) target = $region41
    $region40: #{tpu_custom_call.1} parent=1 // pred_region
      %82 = dma.done [#allocation9], 64
    $region41: #{tpu_custom_call.1} parent=1 // pred_fallthru
      _
    %v83 = vld [vmem:[#allocation7] sm:$0xf]
    %v84 = vld [vmem:[#allocation8] sm:$0xf]
    %v85 = vld [vmem:[#allocation10] sm:$0xf]
    %v86 = vld [vmem:[#allocation2] sm:$0xff]
    %v87 = vld [vmem:[#allocation5] sm:$0xff]
    %v89 = vcombine.high %v87, %v87
    %vm90 = vcmask 31744
    %v92 = vsel %vm90, %v84, 0
    %vm94 = vcmask 1043456
    %v95 = vsel %vm94, %v87, 0
    %v97 = vsel %vm94, %v89, 0
    %99 = vmatprep.subr.mxu0 %v97
    %100 = vmatpush1.msra.mxu0 %v95
    %101 = vmatprep.subr.mxu0 0.0
    %102 = vmatpush1.msra.mxu0 0.0
    %103 = vmatprep.subr.mxu0 0.0
    %104 = vmatpush1.msra.mxu0 0.0
    %105 = vmatprep.subr.mxu0 0.0
    %106 = vmatpush1.msra.mxu0 0.0
    %107 = vmatprep.subr.mxu0 0.0
    %108 = vmatpush1.msra.mxu0 0.0
    %109 = vmatprep.subr.mxu0 0.0
    %110 = vmatpush1.msra.mxu0 0.0
    %111 = vmatprep.subr.mxu0 0.0
    %112 = vmatpush1.msra.mxu0 0.0
    %113 = vmatprep.subr.mxu0 0.0
    %114 = vmatpush1.msra.mxu0 0.0
    %115 = vmatprep.subr.mxu0 0.0
    %116 = vmatpush1.msra.mxu0 0.0
    %117 = vmatprep.subr.mxu0 0.0
    %118 = vmatpush1.msra.mxu0 0.0
    %119 = vmatprep.subr.mxu0 0.0
    %120 = vmatpush1.msra.mxu0 0.0
    %121 = vmatprep.subr.mxu0 0.0
    %122 = vmatpush1.msra.mxu0 0.0
    %123 = vmatprep.subr.mxu0 0.0
    %124 = vmatpush1.msra.mxu0 0.0
    %125 = vmatprep.subr.mxu0 0.0
    %126 = vmatpush1.msra.mxu0 0.0
    %127 = vmatprep.subr.mxu0 0.0
    %128 = vmatpush1.msra.mxu0 0.0
    %129 = vmatprep.subr.mxu0 0.0
    %130 = vmatpush1.msra.mxu0 0.0
    %131 = vmatprep.subr.mxu0 0.0
    %132 = vmatpush1.msra.mxu0 0.0
    %133 = vmatprep.subr.mxu0 0.0
    %134 = vmatpush1.msra.mxu0 0.0
    %135 = vmatprep.subr.mxu0 0.0
    %136 = vmatpush1.msra.mxu0 0.0
    %137 = vmatprep.subr.mxu0 0.0
    %138 = vmatpush1.msra.mxu0 0.0
    %139 = vmatprep.subr.mxu0 0.0
    %140 = vmatpush1.msra.mxu0 0.0
    %141 = vmatprep.subr.mxu0 0.0
    %142 = vmatpush1.msra.mxu0 0.0
    %143 = vmatprep.subr.mxu0 0.0
    %144 = vmatpush1.msra.mxu0 0.0
    %145 = vmatprep.subr.mxu0 0.0
    %146 = vmatpush1.msra.mxu0 0.0
    %147 = vmatprep.subr.mxu0 0.0
    %148 = vmatpush1.msra.mxu0 0.0
    %149 = vmatprep.subr.mxu0 0.0
    %150 = vmatpush1.msra.mxu0 0.0
    %151 = vmatprep.subr.mxu0 0.0
    %152 = vmatpush1.msra.mxu0 0.0
    %153 = vmatprep.subr.mxu0 0.0
    %154 = vmatpush1.msra.mxu0 0.0
    %155 = vmatprep.subr.mxu0 0.0
    %156 = vmatpush1.msra.mxu0 0.0
    %157 = vmatprep.subr.mxu0 0.0
    %158 = vmatpush1.msra.mxu0 0.0
    %159 = vmatprep.subr.mxu0 0.0
    %160 = vmatpush1.msra.mxu0 0.0
    %161 = vmatprep.subr.mxu0 0.0
    %162 = vmatpush1.msra.mxu0 0.0
    %163 = vmatprep.mubr.f32.mxu0 0.0
    %164 = vmatmul.mubr.f32.gmra.mrb[0].mxu0 %v92
    %v165 = vpop.f32.mrb[0].mxu0
    %v166 = vadd.f32 0.0, %v165
    %v167 = vpop.f32.mrb[0].mxu0
    %v168 = vadd.f32 0.0, %v167
    %169 = vdwg.mxu0
    %v171 = vcombine.high %v86, %v86
    %v173 = vsel %vm90, %v83, 0
    %v175 = vsel %vm94, %v86, 0
    %v177 = vsel %vm94, %v171, 0
    %179 = vmatprep.subr.mxu0 %v177
    %180 = vmatpush1.msra.mxu0 %v175
    %181 = vmatprep.subr.mxu0 0.0
    %182 = vmatpush1.msra.mxu0 0.0
    %183 = vmatprep.subr.mxu0 0.0
    %184 = vmatpush1.msra.mxu0 0.0
    %185 = vmatprep.subr.mxu0 0.0
    %186 = vmatpush1.msra.mxu0 0.0
    %187 = vmatprep.subr.mxu0 0.0
    %188 = vmatpush1.msra.mxu0 0.0
    %189 = vmatprep.subr.mxu0 0.0
    %190 = vmatpush1.msra.mxu0 0.0
    %191 = vmatprep.subr.mxu0 0.0
    %192 = vmatpush1.msra.mxu0 0.0
    %193 = vmatprep.subr.mxu0 0.0
    %194 = vmatpush1.msra.mxu0 0.0
    %195 = vmatprep.subr.mxu0 0.0
    %196 = vmatpush1.msra.mxu0 0.0
    %197 = vmatprep.subr.mxu0 0.0
    %198 = vmatpush1.msra.mxu0 0.0
    %199 = vmatprep.subr.mxu0 0.0
    %200 = vmatpush1.msra.mxu0 0.0
    %201 = vmatprep.subr.mxu0 0.0
    %202 = vmatpush1.msra.mxu0 0.0
    %203 = vmatprep.subr.mxu0 0.0
    %204 = vmatpush1.msra.mxu0 0.0
    %205 = vmatprep.subr.mxu0 0.0
    %206 = vmatpush1.msra.mxu0 0.0
    %207 = vmatprep.subr.mxu0 0.0
    %208 = vmatpush1.msra.mxu0 0.0
    %209 = vmatprep.subr.mxu0 0.0
    %210 = vmatpush1.msra.mxu0 0.0
    %211 = vmatprep.subr.mxu0 0.0
    %212 = vmatpush1.msra.mxu0 0.0
    %213 = vmatprep.subr.mxu0 0.0
    %214 = vmatpush1.msra.mxu0 0.0
    %215 = vmatprep.subr.mxu0 0.0
    %216 = vmatpush1.msra.mxu0 0.0
    %217 = vmatprep.subr.mxu0 0.0
    %218 = vmatpush1.msra.mxu0 0.0
    %219 = vmatprep.subr.mxu0 0.0
    %220 = vmatpush1.msra.mxu0 0.0
    %221 = vmatprep.subr.mxu0 0.0
    %222 = vmatpush1.msra.mxu0 0.0
    %223 = vmatprep.subr.mxu0 0.0
    %224 = vmatpush1.msra.mxu0 0.0
    %225 = vmatprep.subr.mxu0 0.0
    %226 = vmatpush1.msra.mxu0 0.0
    %227 = vmatprep.subr.mxu0 0.0
    %228 = vmatpush1.msra.mxu0 0.0
    %229 = vmatprep.subr.mxu0 0.0
    %230 = vmatpush1.msra.mxu0 0.0
    %231 = vmatprep.subr.mxu0 0.0
    %232 = vmatpush1.msra.mxu0 0.0
    %233 = vmatprep.subr.mxu0 0.0
    %234 = vmatpush1.msra.mxu0 0.0
    %235 = vmatprep.subr.mxu0 0.0
    %236 = vmatpush1.msra.mxu0 0.0
    %237 = vmatprep.subr.mxu0 0.0
    %238 = vmatpush1.msra.mxu0 0.0
    %239 = vmatprep.subr.mxu0 0.0
    %240 = vmatpush1.msra.mxu0 0.0
    %241 = vmatprep.subr.mxu0 0.0
    %242 = vmatpush1.msra.mxu0 0.0
    %243 = vmatprep.mubr.f32.mxu0 0.0
    %244 = vmatmul.mubr.f32.gmra.mrb[0].mxu0 %v173
    %v245 = vpop.f32.mrb[0].mxu0
    %v246 = vadd.f32 %v166, %v245
    %v247 = vpop.f32.mrb[0].mxu0
    %v248 = vadd.f32 %v168, %v247
    %249 = vdwg.mxu0
    %251 = vset.pattern.permute.xlu0 0
    %252 = vperm.xlu0 %251, %v85
    %v253 = vpop.permute.xlu0 %252
    %v255 = vadd.f32 %v246, %v253
    %v256 = vadd.f32 %v248, %v253
    %v259 = vcombine.low %v255, %v256
    %261 = vst [vmem:[#allocation11] sm:$0xff] %v259
    %s262 = scalar_lea.vmem [#allocation2], 8
    %v263 = vld [vmem:[%s262] sm:$0xff]
    %s264 = scalar_lea.vmem [#allocation5], 8
    %v265 = vld [vmem:[%s264] sm:$0xff]
    %v267 = vcombine.high %v265, %v265
    %v268 = vsel %vm94, %v265, 0
    %v270 = vsel %vm94, %v267, 0
    %272 = vmatprep.subr.mxu0 %v270
    %273 = vmatpush1.msra.mxu0 %v268
    %274 = vmatprep.subr.mxu0 0.0
    %275 = vmatpush1.msra.mxu0 0.0
    %276 = vmatprep.subr.mxu0 0.0
    %277 = vmatpush1.msra.mxu0 0.0
    %278 = vmatprep.subr.mxu0 0.0
    %279 = vmatpush1.msra.mxu0 0.0
    %280 = vmatprep.subr.mxu0 0.0
    %281 = vmatpush1.msra.mxu0 0.0
    %282 = vmatprep.subr.mxu0 0.0
    %283 = vmatpush1.msra.mxu0 0.0
    %284 = vmatprep.subr.mxu0 0.0
    %285 = vmatpush1.msra.mxu0 0.0
    %286 = vmatprep.subr.mxu0 0.0
    %287 = vmatpush1.msra.mxu0 0.0
    %288 = vmatprep.subr.mxu0 0.0
    %289 = vmatpush1.msra.mxu0 0.0
    %290 = vmatprep.subr.mxu0 0.0
    %291 = vmatpush1.msra.mxu0 0.0
    %292 = vmatprep.subr.mxu0 0.0
    %293 = vmatpush1.msra.mxu0 0.0
    %294 = vmatprep.subr.mxu0 0.0
    %295 = vmatpush1.msra.mxu0 0.0
    %296 = vmatprep.subr.mxu0 0.0
    %297 = vmatpush1.msra.mxu0 0.0
    %298 = vmatprep.subr.mxu0 0.0
    %299 = vmatpush1.msra.mxu0 0.0
    %300 = vmatprep.subr.mxu0 0.0
    %301 = vmatpush1.msra.mxu0 0.0
    %302 = vmatprep.subr.mxu0 0.0
    %303 = vmatpush1.msra.mxu0 0.0
    %304 = vmatprep.subr.mxu0 0.0
    %305 = vmatpush1.msra.mxu0 0.0
    %306 = vmatprep.subr.mxu0 0.0
    %307 = vmatpush1.msra.mxu0 0.0
    %308 = vmatprep.subr.mxu0 0.0
    %309 = vmatpush1.msra.mxu0 0.0
    %310 = vmatprep.subr.mxu0 0.0
    %311 = vmatpush1.msra.mxu0 0.0
    %312 = vmatprep.subr.mxu0 0.0
    %313 = vmatpush1.msra.mxu0 0.0
    %314 = vmatprep.subr.mxu0 0.0
    %315 = vmatpush1.msra.mxu0 0.0
    %316 = vmatprep.subr.mxu0 0.0
    %317 = vmatpush1.msra.mxu0 0.0
    %318 = vmatprep.subr.mxu0 0.0
    %319 = vmatpush1.msra.mxu0 0.0
    %320 = vmatprep.subr.mxu0 0.0
    %321 = vmatpush1.msra.mxu0 0.0
    %322 = vmatprep.subr.mxu0 0.0
    %323 = vmatpush1.msra.mxu0 0.0
    %324 = vmatprep.subr.mxu0 0.0
    %325 = vmatpush1.msra.mxu0 0.0
    %326 = vmatprep.subr.mxu0 0.0
    %327 = vmatpush1.msra.mxu0 0.0
    %328 = vmatprep.subr.mxu0 0.0
    %329 = vmatpush1.msra.mxu0 0.0
    %330 = vmatprep.subr.mxu0 0.0
    %331 = vmatpush1.msra.mxu0 0.0
    %332 = vmatprep.subr.mxu0 0.0
    %333 = vmatpush1.msra.mxu0 0.0
    %334 = vmatprep.subr.mxu0 0.0
    %335 = vmatpush1.msra.mxu0 0.0
    %336 = vmatprep.mubr.f32.mxu0 0.0
    %337 = vmatmul.mubr.f32.gmra.mrb[0].mxu0 %v92
    %v338 = vpop.f32.mrb[0].mxu0
    %v339 = vadd.f32 0.0, %v338
    %v340 = vpop.f32.mrb[0].mxu0
    %v341 = vadd.f32 0.0, %v340
    %342 = vdwg.mxu0
    %v344 = vcombine.high %v263, %v263
    %v345 = vsel %vm94, %v263, 0
    %v347 = vsel %vm94, %v344, 0
    %349 = vmatprep.subr.mxu0 %v347
    %350 = vmatpush1.msra.mxu0 %v345
    %351 = vmatprep.subr.mxu0 0.0
    %352 = vmatpush1.msra.mxu0 0.0
    %353 = vmatprep.subr.mxu0 0.0
    %354 = vmatpush1.msra.mxu0 0.0
    %355 = vmatprep.subr.mxu0 0.0
    %356 = vmatpush1.msra.mxu0 0.0
    %357 = vmatprep.subr.mxu0 0.0
    %358 = vmatpush1.msra.mxu0 0.0
    %359 = vmatprep.subr.mxu0 0.0
    %360 = vmatpush1.msra.mxu0 0.0
    %361 = vmatprep.subr.mxu0 0.0
    %362 = vmatpush1.msra.mxu0 0.0
    %363 = vmatprep.subr.mxu0 0.0
    %364 = vmatpush1.msra.mxu0 0.0
    %365 = vmatprep.subr.mxu0 0.0
    %366 = vmatpush1.msra.mxu0 0.0
    %367 = vmatprep.subr.mxu0 0.0
    %368 = vmatpush1.msra.mxu0 0.0
    %369 = vmatprep.subr.mxu0 0.0
    %370 = vmatpush1.msra.mxu0 0.0
    %371 = vmatprep.subr.mxu0 0.0
    %372 = vmatpush1.msra.mxu0 0.0
    %373 = vmatprep.subr.mxu0 0.0
    %374 = vmatpush1.msra.mxu0 0.0
    %375 = vmatprep.subr.mxu0 0.0
    %376 = vmatpush1.msra.mxu0 0.0
    %377 = vmatprep.subr.mxu0 0.0
    %378 = vmatpush1.msra.mxu0 0.0
    %379 = vmatprep.subr.mxu0 0.0
    %380 = vmatpush1.msra.mxu0 0.0
    %381 = vmatprep.subr.mxu0 0.0
    %382 = vmatpush1.msra.mxu0 0.0
    %383 = vmatprep.subr.mxu0 0.0
    %384 = vmatpush1.msra.mxu0 0.0
    %385 = vmatprep.subr.mxu0 0.0
    %386 = vmatpush1.msra.mxu0 0.0
    %387 = vmatprep.subr.mxu0 0.0
    %388 = vmatpush1.msra.mxu0 0.0
    %389 = vmatprep.subr.mxu0 0.0
    %390 = vmatpush1.msra.mxu0 0.0
    %391 = vmatprep.subr.mxu0 0.0
    %392 = vmatpush1.msra.mxu0 0.0
    %393 = vmatprep.subr.mxu0 0.0
    %394 = vmatpush1.msra.mxu0 0.0
    %395 = vmatprep.subr.mxu0 0.0
    %396 = vmatpush1.msra.mxu0 0.0
    %397 = vmatprep.subr.mxu0 0.0
    %398 = vmatpush1.msra.mxu0 0.0
    %399 = vmatprep.subr.mxu0 0.0
    %400 = vmatpush1.msra.mxu0 0.0
    %401 = vmatprep.subr.mxu0 0.0
    %402 = vmatpush1.msra.mxu0 0.0
    %403 = vmatprep.subr.mxu0 0.0
    %404 = vmatpush1.msra.mxu0 0.0
    %405 = vmatprep.subr.mxu0 0.0
    %406 = vmatpush1.msra.mxu0 0.0
    %407 = vmatprep.subr.mxu0 0.0
    %408 = vmatpush1.msra.mxu0 0.0
    %409 = vmatprep.subr.mxu0 0.0
    %410 = vmatpush1.msra.mxu0 0.0
    %411 = vmatprep.subr.mxu0 0.0
    %412 = vmatpush1.msra.mxu0 0.0
    %413 = vmatprep.mubr.f32.mxu0 0.0
    %414 = vmatmul.mubr.f32.gmra.mrb[0].mxu0 %v173
    %v415 = vpop.f32.mrb[0].mxu0
    %v416 = vadd.f32 %v339, %v415
    %v417 = vpop.f32.mrb[0].mxu0
    %v418 = vadd.f32 %v341, %v417
    %419 = vdwg.mxu0
    %v420 = vadd.f32 %v416, %v253
    %v421 = vadd.f32 %v418, %v253
    %v424 = vcombine.low %v420, %v421
    %s426 = scalar_lea.vmem [#allocation11], 8
    %427 = vst [vmem:[%s426] sm:$0xff] %v424
    // Predicated region
    $region42: #{tpu_custom_call.1} parent=1 // pred_check
      _
    $region43: #{tpu_custom_call.1} parent=1 // pred_check_branch
      %429 = sbr.rel (0) target = $region45
    $region44: #{tpu_custom_call.1} parent=1 // pred_region
      %s431 = ssub.s32 256, 256
      %432 = vsyncadd [#allocation4], %s431
      %s433 = sshll.u32 [#allocation11], 4
      %s434 = int_to_ptr.vmem [resolvable:$true] %s433
      %439 = dma.vmem_to_hbm [thread:$0]  %s434, 256, %s5, [#allocation4], 128, 128, 8
    $region45: #{tpu_custom_call.1} parent=1 // pred_fallthru
      _
    // Predicated region
    $region46: #{tpu_custom_call.1} parent=1 // pred_check
      _
    $region47: #{tpu_custom_call.1} parent=1 // pred_check_branch
      %441 = sbr.rel (0) target = $region49
    $region48: #{tpu_custom_call.1} parent=1 // pred_region
      %442 = dma.done [#allocation4], 256
    $region49: #{tpu_custom_call.1} parent=1 // pred_fallthru
      _
    %443 = vsyncpa [#allocation3], 1
    %444 = vsyncpa [#allocation6], 1
    %445 = vsyncpa [#allocation9], 1
    %446 = vsyncpa [#allocation4], 1

</llo_original>
